<compile_context>
chip_gen: v7x
topology: tpu7x:2x2x1
jax: 0.10.0
libtpu: 0.0.40
codegen_flags: <defaults>
</compile_context>

<pallas_src>
import jax
import jax.numpy as jnp
from jax.experimental import pallas as pl
from jax.experimental.pallas import tpu as pltpu


# -----------------------------------------------------------------------------
# In-kernel math helpers
# -----------------------------------------------------------------------------
def _elu(x):
    # ELU(alpha=1.0); exp only evaluated on x <= 0 so it never produces inf.
    return jnp.where(x > 0, x, jnp.exp(jnp.minimum(x, 0.0)) - 1.0)


def _sigmoid(x):
    # Numerically stable sigmoid: exp(-|x|) never overflows, output in (0, 1).
    z = jnp.exp(-jnp.abs(x))
    inv = pl.reciprocal(1.0 + z)  # exact; approx=True would move it to the EUP
    return jnp.where(x >= 0, inv, z * inv)


# -----------------------------------------------------------------------------
# Fused-parameter slab layout
# -----------------------------------------------------------------------------
def _align8(n):
    return ((n + 7) // 8) * 8


def _lane_width(layers):
    """Lane width of the packed slab / padded activations (multiple of 128)."""
    widest = max(2 * d for d in layers[1:])
    return max(128, ((widest + 127) // 128) * 128)


def _fused_layout(layers, lane):
    """Row layout of the packed slab.

    Returns (entries, total_rows) where entries[j] = (row_offset, n_rows) for
    the j-th packed tensor, in order: W1, b1, W2, b2, ..., Wk, bk, W_out.
    Every block starts at an 8-row-aligned offset (tile-aligned slices).
    """
    nh = len(layers) - 2
    entries = []
    r = 0
    for i in range(nh):
        w_rows = layers[0] if i == 0 else lane
        entries.append((r, w_rows))
        r = _align8(r + w_rows)
        entries.append((r, 1))          # bias row
        r = _align8(r + 1)
    w_rows = layers[0] if nh == 0 else lane
    entries.append((r, w_rows))
    r = _align8(r + w_rows)
    return entries, r


def pack_policy_params(mu_params, sc_params, layers, lane):
    """Fuse mu/scale params (concat first layer, block-diag deeper layers) and
    pack them, zero-padded to `lane` columns, into one f32 slab [rows, lane]."""
    nh = len(layers) - 2
    entries, total_rows = _fused_layout(layers, lane)
    slab = jnp.zeros((total_rows, lane), jnp.float32)

    def blockdiag(a, b):
        za = jnp.zeros_like(a)
        zb = jnp.zeros_like(b)
        return jnp.concatenate(
            [jnp.concatenate([a, zb], axis=1),
             jnp.concatenate([za, b], axis=1)], axis=0)

    e = 0
    for i in range(nh):
        w_mu, b_mu = mu_params[2 * i], mu_params[2 * i + 1]
        w_sc, b_sc = sc_params[2 * i], sc_params[2 * i + 1]
        w_f = (jnp.concatenate([w_mu, w_sc], axis=1) if i == 0
               else blockdiag(w_mu, w_sc))
        b_f = jnp.concatenate([b_mu, b_sc], axis=1)
        off, _ = entries[e]; e += 1
        slab = slab.at[off:off + w_f.shape[0], :w_f.shape[1]].set(w_f)
        off_b, _ = entries[e]; e += 1
        slab = slab.at[off_b:off_b + 1, :b_f.shape[1]].set(b_f)

    w_mu_o, w_sc_o = mu_params[2 * nh], sc_params[2 * nh]
    w_f = (jnp.concatenate([w_mu_o, w_sc_o], axis=1) if nh == 0
           else blockdiag(w_mu_o, w_sc_o))
    off, _ = entries[e]
    slab = slab.at[off:off + w_f.shape[0], :w_f.shape[1]].set(w_f)
    return slab


# -----------------------------------------------------------------------------
# Kernel
# -----------------------------------------------------------------------------
def make_policy_kernel(layers, lane):
    nh = len(layers) - 2
    d_out = layers[-1]
    entries, _ = _fused_layout(layers, lane)

    def kernel(state_ref, slab_ref, out_ref):
        h = state_ref[...].astype(jnp.float32)          # [bm, d_in]
        e = 0
        for i in range(nh):
            w_off, w_rows = entries[e]; e += 1
            b_off, _ = entries[e]; e += 1
            w = slab_ref[w_off:w_off + w_rows, :]        # [rows, lane]
            b = slab_ref[b_off:b_off + 1, :]             # [1, lane]
            h = jnp.dot(h, w, preferred_element_type=jnp.float32) + b
            h = _elu(h)                                  # padded cols stay 0
        w_off, w_rows = entries[e]
        w_o = slab_ref[w_off:w_off + w_rows, :]
        o = jnp.dot(h, w_o, preferred_element_type=jnp.float32)  # [bm, lane]
        # mu in cols [0:d_out], scale logits in [d_out:2*d_out]; apply the
        # sigmoid only to the scale columns, store one lane-dense slab.
        col = jax.lax.broadcasted_iota(jnp.int32, o.shape, 1)
        out_ref[...] = jnp.where(col < d_out, o, _sigmoid(o)).astype(out_ref.dtype)

    return kernel


# -----------------------------------------------------------------------------
# Wrapper
# -----------------------------------------------------------------------------
def policy_forward(state, slab, layers, lane):
    """Runs the fused Policy forward. Returns (mu, scale)."""
    B, d_in = state.shape
    d_out = layers[-1]

    # Batch tiling: shard large batches across TensorCores; single block at
    # tiny B. (Block must divide B or equal it.)
    bm = min(B, 512)
    if B % bm != 0:
        bm = B
    grid = (B // bm,)

    kernel = make_policy_kernel(layers, lane)
    out = pl.pallas_call(
        kernel,
        out_shape=jax.ShapeDtypeStruct((B, lane), jnp.float32),
        grid=grid,
        in_specs=[
            pl.BlockSpec((bm, d_in), lambda i: (i, 0)),
            pl.BlockSpec(slab.shape, lambda i: (0, 0)),   # weights resident
        ],
        out_specs=pl.BlockSpec((bm, lane), lambda i: (i, 0)),
        compiler_params=pltpu.CompilerParams(
            dimension_semantics=("parallel",),
            vmem_limit_bytes=32 * 1024 * 1024,
        ),
    )(state, slab)

    mu = out[:, :d_out]
    scale = out[:, d_out:2 * d_out]
    return mu, scale


# -----------------------------------------------------------------------------
# Parameter init (deterministic, PyTorch-Linear-like uniform fan-in scaling)
# -----------------------------------------------------------------------------
def init_mlp_params(key, layers):
    """Returns a flat list: [W1, b1, ..., Wk, bk, W_out].
    Weights stored as [d_in, d_out] (already transposed vs. torch)."""
    params = []
    dims = list(layers)
    for i in range(len(dims) - 2):
        d_in, d_out = dims[i], dims[i + 1]
        key, kw, kb = jax.random.split(key, 3)
        bound = 1.0 / jnp.sqrt(d_in)
        w = jax.random.uniform(kw, (d_in, d_out), jnp.float32, -bound, bound)
        b = jax.random.uniform(kb, (1, d_out), jnp.float32, -bound, bound)
        params += [w, b]
    d_in, d_out = dims[-2], dims[-1]
    key, kw = jax.random.split(key)
    bound = 1.0 / jnp.sqrt(d_in)
    params += [jax.random.uniform(kw, (d_in, d_out), jnp.float32, -bound, bound)]
    return params


class PolicyPallas:
    """Mirrors Policy: mu = MLP(state); scale = sigmoid(MLP(state)).
    Both heads are fused into one packed weight slab at construction time."""
    # TODO(synk): ScaledTanhTransformedGaussian (sampling / log_prob) has no
    # Pallas equivalent here; only the parameterizing forward pass is kernelized.

    def __init__(self, layers, min=-1.0, max=1.0, key=None):
        key = jax.random.PRNGKey(0) if key is None else key
        k_mu, k_sc = jax.random.split(key)
        self.layers = list(layers)
        self.min = min
        self.max = max
        self.lane = _lane_width(self.layers)
        self.mu_params = init_mlp_params(k_mu, layers)
        self.scale_params = init_mlp_params(k_sc, layers)
        self.param_slab = pack_policy_params(
            self.mu_params, self.scale_params, self.layers, self.lane)

    def __call__(self, state):
        mu, scale = policy_forward(state, self.param_slab, self.layers, self.lane)
        return {"mu": mu, "scale": scale, "min": self.min, "max": self.max}


# -----------------------------------------------------------------------------
# Pure-JAX reference for correctness (unfused, per-head)
# -----------------------------------------------------------------------------
def mlp_ref(x, params, num_hidden):
    h = x
    for i in range(num_hidden):
        h = h @ params[2 * i] + params[2 * i + 1]
        h = jnp.where(h > 0, h, jnp.exp(jnp.minimum(h, 0.0)) - 1.0)
    return h @ params[2 * num_hidden]


def policy_ref(state, mu_params, sc_params, layers):
    nh = len(layers) - 2
    mu = mlp_ref(state, mu_params, nh)
    sc = jax.nn.sigmoid(mlp_ref(state, sc_params, nh))
    return mu, sc


# -----------------------------------------------------------------------------
if __name__ == "__main__":
    # Small shapes consistent with the module: state [B, layers[0]]
    layers = [16, 32, 32, 4]   # D_in=16, two hidden of 32, action dim 4
    B = 8

    key = jax.random.PRNGKey(0)
    k_state, k_params = jax.random.split(key)
    state = jax.random.normal(k_state, (B, layers[0]), dtype=jnp.float32)

    policy = PolicyPallas(layers, min=-1.0, max=1.0, key=k_params)

    out = policy(state)
    mu = jax.block_until_ready(out["mu"])
    scale = jax.block_until_ready(out["scale"])

    # Verify against pure-JAX (unfused) reference
    mu_ref, scale_ref = policy_ref(state, policy.mu_params,
                                   policy.scale_params, layers)
    assert mu.shape == (B, layers[-1]) and scale.shape == (B, layers[-1])
    assert jnp.allclose(mu, mu_ref, atol=1e-5, rtol=1e-5)
    assert jnp.allclose(scale, scale_ref, atol=1e-5, rtol=1e-5)
    assert bool(jnp.all((scale > 0.0) & (scale < 1.0)))

    print("KERNEL_OK")
</pallas_src>

<mosaic_0001>
module attributes {stable_mosaic.version = 11 : i64} {
  func.func @kernel(%arg0: i32, %arg1: memref<8x16xf32, #tpu.memory_space<vmem>>, %arg2: memref<288x128xf32, #tpu.memory_space<vmem>>, %arg3: memref<8x128xf32, #tpu.memory_space<vmem>>) attributes {dimension_semantics = [#tpu.dimension_semantics<parallel>], iteration_bounds = array<i64: 1>, scalar_prefetch = 0 : i64, scratch_operands = 0 : i64, tpu.core_type = #tpu.core_type<tc>, window_params = [{transform_indices = @transform_0, window_bounds = array<i64: 8, 16>}, {pipeline_mode = #tpu.pipeline_mode<synchronous>, transform_indices = @transform_1, window_bounds = array<i64: 288, 128>}, {transform_indices = @transform_2, window_bounds = array<i64: 8, 128>}]} {
    %c0 = arith.constant 0 : index
    %c0_0 = arith.constant 0 : index
    %0 = vector.load %arg1[%c0, %c0_0] : memref<8x16xf32, #tpu.memory_space<vmem>>, vector<8x16xf32>
    %c0_1 = arith.constant 0 : index
    %c0_2 = arith.constant 0 : index
    %1 = vector.load %arg2[%c0_1, %c0_2] : memref<288x128xf32, #tpu.memory_space<vmem>>, vector<16x128xf32>
    %c16 = arith.constant 16 : index
    %c0_3 = arith.constant 0 : index
    %2 = vector.load %arg2[%c16, %c0_3] : memref<288x128xf32, #tpu.memory_space<vmem>>, vector<1x128xf32>
    %cst = arith.constant dense<0.000000e+00> : vector<8x128xf32>
    %3 = tpu.matmul %0, %1, %cst {dimension_numbers = #tpu.dot_dimension_numbers<[1], [0], [0], [1], [0, 0, 1, 1], [], []>} : vector<8x16xf32>, vector<16x128xf32>, vector<8x128xf32> -> vector<8x128xf32>
    %4 = vector.broadcast %2 : vector<1x128xf32> to vector<8x128xf32>
    %5 = arith.addf %3, %4 : vector<8x128xf32>
    %cst_4 = arith.constant 0.000000e+00 : f32
    %6 = vector.broadcast %cst_4 : f32 to vector<8x128xf32>
    %7 = arith.cmpf ogt, %5, %6 : vector<8x128xf32>
    %cst_5 = arith.constant 0.000000e+00 : f32
    %8 = vector.broadcast %cst_5 : f32 to vector<8x128xf32>
    %9 = arith.minimumf %5, %8 : vector<8x128xf32>
    %10 = math.exp %9 : vector<8x128xf32>
    %cst_6 = arith.constant 1.000000e+00 : f32
    %11 = vector.broadcast %cst_6 : f32 to vector<8x128xf32>
    %12 = arith.subf %10, %11 : vector<8x128xf32>
    %13 = arith.select %7, %5, %12 : vector<8x128xi1>, vector<8x128xf32>
    %c24 = arith.constant 24 : index
    %c0_7 = arith.constant 0 : index
    %14 = vector.load %arg2[%c24, %c0_7] : memref<288x128xf32, #tpu.memory_space<vmem>>, vector<128x128xf32>
    %c152 = arith.constant 152 : index
    %c0_8 = arith.constant 0 : index
    %15 = vector.load %arg2[%c152, %c0_8] : memref<288x128xf32, #tpu.memory_space<vmem>>, vector<1x128xf32>
    %cst_9 = arith.constant dense<0.000000e+00> : vector<8x128xf32>
    %16 = tpu.matmul %13, %14, %cst_9 {dimension_numbers = #tpu.dot_dimension_numbers<[1], [0], [0], [1], [0, 0, 1, 1], [], []>} : vector<8x128xf32>, vector<128x128xf32>, vector<8x128xf32> -> vector<8x128xf32>
    %17 = vector.broadcast %15 : vector<1x128xf32> to vector<8x128xf32>
    %18 = arith.addf %16, %17 : vector<8x128xf32>
    %cst_10 = arith.constant 0.000000e+00 : f32
    %19 = vector.broadcast %cst_10 : f32 to vector<8x128xf32>
    %20 = arith.cmpf ogt, %18, %19 : vector<8x128xf32>
    %cst_11 = arith.constant 0.000000e+00 : f32
    %21 = vector.broadcast %cst_11 : f32 to vector<8x128xf32>
    %22 = arith.minimumf %18, %21 : vector<8x128xf32>
    %23 = math.exp %22 : vector<8x128xf32>
    %cst_12 = arith.constant 1.000000e+00 : f32
    %24 = vector.broadcast %cst_12 : f32 to vector<8x128xf32>
    %25 = arith.subf %23, %24 : vector<8x128xf32>
    %26 = arith.select %20, %18, %25 : vector<8x128xi1>, vector<8x128xf32>
    %c160 = arith.constant 160 : index
    %c0_13 = arith.constant 0 : index
    %27 = vector.load %arg2[%c160, %c0_13] : memref<288x128xf32, #tpu.memory_space<vmem>>, vector<128x128xf32>
    %cst_14 = arith.constant dense<0.000000e+00> : vector<8x128xf32>
    %28 = tpu.matmul %26, %27, %cst_14 {dimension_numbers = #tpu.dot_dimension_numbers<[1], [0], [0], [1], [0, 0, 1, 1], [], []>} : vector<8x128xf32>, vector<128x128xf32>, vector<8x128xf32> -> vector<8x128xf32>
    %29 = tpu.iota {dimensions = array<i32: 1>} : vector<8x128xi32>
    %c4_i32 = arith.constant 4 : i32
    %30 = vector.broadcast %c4_i32 : i32 to vector<8x128xi32>
    %31 = arith.cmpi slt, %29, %30 : vector<8x128xi32>
    %32 = math.absf %28 : vector<8x128xf32>
    %cst_15 = arith.constant 0.000000e+00 : f32
    %33 = vector.broadcast %cst_15 : f32 to vector<8x128xf32>
    %34 = arith.subf %33, %32 : vector<8x128xf32>
    %35 = math.exp %34 : vector<8x128xf32>
    %cst_16 = arith.constant 1.000000e+00 : f32
    %36 = vector.broadcast %cst_16 : f32 to vector<8x128xf32>
    %37 = arith.addf %36, %35 : vector<8x128xf32>
    %38 = tpu.reciprocal %37 : vector<8x128xf32> -> vector<8x128xf32>
    %cst_17 = arith.constant 0.000000e+00 : f32
    %39 = vector.broadcast %cst_17 : f32 to vector<8x128xf32>
    %40 = arith.cmpf oge, %28, %39 : vector<8x128xf32>
    %41 = arith.mulf %35, %38 : vector<8x128xf32>
    %42 = arith.select %40, %38, %41 : vector<8x128xi1>, vector<8x128xf32>
    %43 = arith.select %31, %28, %42 : vector<8x128xi1>, vector<8x128xf32>
    %c0_18 = arith.constant 0 : index
    %c0_19 = arith.constant 0 : index
    %44 = vector.load %arg3[%c0_18, %c0_19] : memref<8x128xf32, #tpu.memory_space<vmem>>, vector<8x128xf32>
    tpu.vector_store %arg3[%c0_18, %c0_19], %43 {strides = array<i32>} : memref<8x128xf32, #tpu.memory_space<vmem>>, vector<8x128xf32>,
    return
  }
  func.func @transform_0(%arg0: i32) -> (i32, i32) {
    %c0_i32 = arith.constant 0 : i32
    %c0_i32_0 = arith.constant 0 : i32
    return %arg0, %c0_i32 : i32, i32
  }
  func.func @transform_1(%arg0: i32) -> (i32, i32) {
    %c0_i32 = arith.constant 0 : i32
    %c0_i32_0 = arith.constant 0 : i32
    %c0_i32_1 = arith.constant 0 : i32
    return %c0_i32, %c0_i32_0 : i32, i32
  }
  func.func @transform_2(%arg0: i32) -> (i32, i32) {
    %c0_i32 = arith.constant 0 : i32
    %c0_i32_0 = arith.constant 0 : i32
    return %arg0, %c0_i32 : i32, i32
  }
}

</mosaic_0001>

<llo_original>
// kernel: tpu_custom_call.1
$region0: #{tpu_custom_call.1}
  #allocation0 [shape = 'u32[]', space=smem, size = 0x4, offset = 0x4, fixed_abs, tag = 'smem constant byte address 0x4 - core index']
  #allocation1 [shape = 'u32[144,128]{1,0:T(1,128)}', space=vmem, size = 0x12000, scoped, tag = 'internal scratch']
  %s0 = inlined_call_operand.hbm [shape: f32[8,16], index: 0, kind: input, shape index: {}]
  %s1 = inlined_call_operand.hbm [shape: f32[288,128], index: 1, kind: input, shape index: {}]
  %s2 = inlined_call_operand.hbm [shape: f32[8,128], index: 2, kind: output, shape index: {}]
  %s3 = sld [smem:[#allocation0]]
  $region26: #{tpu_custom_call.1} parent=0
    _
  %s5 = ssub.s32 1, %s3
  %s6 = scalar_select 0, %s5, %s3
  $region1: #{tpu_custom_call.1} parent=0
    #allocation2 [shape = 'u8[4096]{0}', space=vmem, size = 0x1000, scoped, tag = 'input window, operand 0, single buffered']
    #allocation3 [shape = 's32[1]{0}', space=sflag, size = 0x4, scoped, tag = 'scoped memory for tpu_custom_call.1']
    #allocation4 [shape = 's32[1]{0}', space=sflag, size = 0x4, scoped, tag = 'scoped memory for tpu_custom_call.1']
    #allocation5 [shape = 'u8[147456]{0}', space=vmem, size = 0x24000, scoped, tag = 'input window, operand 1, single buffered']
    #allocation6 [shape = 's32[1]{0}', space=sflag, size = 0x4, scoped, tag = 'scoped memory for tpu_custom_call.1']
    #allocation7 [shape = 'u8[4096]{0}', space=vmem, size = 0x1000, scoped, tag = 'output window, operand 0, single buffered']
    %7 = vsyncpa [#allocation3], 0
    %8 = vsyncpa [#allocation6], 0
    %9 = vsyncpa [#allocation4], 0
    // Predicated region
    $region2: #{tpu_custom_call.1} parent=1 // pred_check
      _
    $region3: #{tpu_custom_call.1} parent=1 // pred_check_branch
      %11 = sbr.rel (0) target = $region5
    $region4: #{tpu_custom_call.1} parent=1 // pred_region
      %s13 = ssub.s32 128, 128
      %14 = vsyncadd [#allocation3], %s13
      %s16 = sshll.u32 [#allocation2], 4
      %s17 = int_to_ptr.vmem [resolvable:$true] %s16
      %19 = dma.hbm_to_vmem [thread:$0]  %s0, 128, %s17, [#allocation3]
    $region5: #{tpu_custom_call.1} parent=1 // pred_fallthru
      _
    // Predicated region
    $region6: #{tpu_custom_call.1} parent=1 // pred_check
      _
    $region7: #{tpu_custom_call.1} parent=1 // pred_check_branch
      %21 = sbr.rel (0) target = $region9
    $region8: #{tpu_custom_call.1} parent=1 // pred_region
      %s23 = ssub.s32 4608, 4608
      %24 = vsyncadd [#allocation6], %s23
      %s25 = sshll.u32 [#allocation5], 4
      %s26 = int_to_ptr.vmem [resolvable:$true] %s25
      %31 = dma.hbm_to_vmem [thread:$0]  %s1, 4608, %s26, [#allocation6], 128, 128, 8
    $region9: #{tpu_custom_call.1} parent=1 // pred_fallthru
      _
    // Predicated region
    $region10: #{tpu_custom_call.1} parent=1 // pred_check
      _
    $region11: #{tpu_custom_call.1} parent=1 // pred_check_branch
      %33 = sbr.rel (0) target = $region13
    $region12: #{tpu_custom_call.1} parent=1 // pred_region
      %34 = dma.done [#allocation3], 128
    $region13: #{tpu_custom_call.1} parent=1 // pred_fallthru
      _
    // Predicated region
    $region14: #{tpu_custom_call.1} parent=1 // pred_check
      _
    $region15: #{tpu_custom_call.1} parent=1 // pred_check_branch
      %36 = sbr.rel (0) target = $region17
    $region16: #{tpu_custom_call.1} parent=1 // pred_region
      %37 = dma.done [#allocation6], 4608
    $region17: #{tpu_custom_call.1} parent=1 // pred_fallthru
      _
    %v38 = vld [vmem:[#allocation2] sm:$0xff]
    %v39 = vld [vmem:[#allocation5] sm:$0xff]
    %v40 = vld [vmem:[#allocation5 + $0x8] sm:$0xff]
    %v41 = vld [vmem:[#allocation5 + $0x10] sm:$0x1]
    %v42 = vlaneseq
    %v43 = vshrl.u32 %v42, 7
    %v44 = vsub.s32 0, %v43
    %v45 = vrot.slane %v41, %v44
    %vm46 = vcmask 130048
    %v48 = vsel %vm46, %v38, 0
    %50 = vmatprep.subr.mxu0 0.0
    %51 = vmatpush1.msra.mxu0 %v39
    %52 = vmatprep.subr.mxu0 0.0
    %53 = vmatpush1.msra.mxu0 %v40
    %54 = vmatprep.subr.mxu0 0.0
    %55 = vmatpush1.msra.mxu0 0.0
    %56 = vmatprep.subr.mxu0 0.0
    %57 = vmatpush1.msra.mxu0 0.0
    %58 = vmatprep.subr.mxu0 0.0
    %59 = vmatpush1.msra.mxu0 0.0
    %60 = vmatprep.subr.mxu0 0.0
    %61 = vmatpush1.msra.mxu0 0.0
    %62 = vmatprep.subr.mxu0 0.0
    %63 = vmatpush1.msra.mxu0 0.0
    %64 = vmatprep.subr.mxu0 0.0
    %65 = vmatpush1.msra.mxu0 0.0
    %66 = vmatprep.subr.mxu0 0.0
    %67 = vmatpush1.msra.mxu0 0.0
    %68 = vmatprep.subr.mxu0 0.0
    %69 = vmatpush1.msra.mxu0 0.0
    %70 = vmatprep.subr.mxu0 0.0
    %71 = vmatpush1.msra.mxu0 0.0
    %72 = vmatprep.subr.mxu0 0.0
    %73 = vmatpush1.msra.mxu0 0.0
    %74 = vmatprep.subr.mxu0 0.0
    %75 = vmatpush1.msra.mxu0 0.0
    %76 = vmatprep.subr.mxu0 0.0
    %77 = vmatpush1.msra.mxu0 0.0
    %78 = vmatprep.subr.mxu0 0.0
    %79 = vmatpush1.msra.mxu0 0.0
    %80 = vmatprep.subr.mxu0 0.0
    %81 = vmatpush1.msra.mxu0 0.0
    %82 = vmatprep.subr.mxu0 0.0
    %83 = vmatpush1.msra.mxu0 0.0
    %84 = vmatprep.subr.mxu0 0.0
    %85 = vmatpush1.msra.mxu0 0.0
    %86 = vmatprep.subr.mxu0 0.0
    %87 = vmatpush1.msra.mxu0 0.0
    %88 = vmatprep.subr.mxu0 0.0
    %89 = vmatpush1.msra.mxu0 0.0
    %90 = vmatprep.subr.mxu0 0.0
    %91 = vmatpush1.msra.mxu0 0.0
    %92 = vmatprep.subr.mxu0 0.0
    %93 = vmatpush1.msra.mxu0 0.0
    %94 = vmatprep.subr.mxu0 0.0
    %95 = vmatpush1.msra.mxu0 0.0
    %96 = vmatprep.subr.mxu0 0.0
    %97 = vmatpush1.msra.mxu0 0.0
    %98 = vmatprep.subr.mxu0 0.0
    %99 = vmatpush1.msra.mxu0 0.0
    %100 = vmatprep.subr.mxu0 0.0
    %101 = vmatpush1.msra.mxu0 0.0
    %102 = vmatprep.subr.mxu0 0.0
    %103 = vmatpush1.msra.mxu0 0.0
    %104 = vmatprep.subr.mxu0 0.0
    %105 = vmatpush1.msra.mxu0 0.0
    %106 = vmatprep.subr.mxu0 0.0
    %107 = vmatpush1.msra.mxu0 0.0
    %108 = vmatprep.subr.mxu0 0.0
    %109 = vmatpush1.msra.mxu0 0.0
    %110 = vmatprep.subr.mxu0 0.0
    %111 = vmatpush1.msra.mxu0 0.0
    %112 = vmatprep.subr.mxu0 0.0
    %113 = vmatpush1.msra.mxu0 0.0
    %114 = vmatprep.mubr.f32.mxu0 0.0
    %115 = vmatmul.mubr.f32.gmra.mrb[0].mxu0 %v48
    %v116 = vpop.f32.mrb[0].mxu0
    %v117 = vadd.f32 %v45, %v116
    %v118 = vpop.f32.mrb[0].mxu0
    %119 = vdwg.mxu0
    %vm120 = vcmp.gt.f32.partialorder %v117, 0.0
    %v121 = vmin.f32 %v117, 0.0
    %v122 = vmul.f32 %v121, 1.442695
    %v123 = vpow.pop %v122
    %v124 = vsub.f32 %v123, 1.0
    %v125 = vsel %vm120, %v117, %v124
    %v126 = vld [vmem:[#allocation5 + $0x18] sm:$0xff]
    %v127 = vld [vmem:[#allocation5 + $0x20] sm:$0xff]
    %v128 = vld [vmem:[#allocation5 + $0x28] sm:$0xff]
    %v129 = vld [vmem:[#allocation5 + $0x30] sm:$0xff]
    %v130 = vld [vmem:[#allocation5 + $0x38] sm:$0xff]
    %v131 = vld [vmem:[#allocation5 + $0x40] sm:$0xff]
    %v132 = vld [vmem:[#allocation5 + $0x48] sm:$0xff]
    %v133 = vld [vmem:[#allocation5 + $0x50] sm:$0xff]
    %v134 = vld [vmem:[#allocation5 + $0x58] sm:$0xff]
    %v135 = vld [vmem:[#allocation5 + $0x60] sm:$0xff]
    %v136 = vld [vmem:[#allocation5 + $0x68] sm:$0xff]
    %v137 = vld [vmem:[#allocation5 + $0x70] sm:$0xff]
    %v138 = vld [vmem:[#allocation5 + $0x78] sm:$0xff]
    %v139 = vld [vmem:[#allocation5 + $0x80] sm:$0xff]
    %v140 = vld [vmem:[#allocation5 + $0x88] sm:$0xff]
    %v141 = vld [vmem:[#allocation5 + $0x90] sm:$0xff]
    %v142 = vld [vmem:[#allocation5 + $0x98] sm:$0x1]
    %v143 = vlaneseq
    %v144 = vshrl.u32 %v143, 7
    %v145 = vsub.s32 0, %v144
    %v146 = vrot.slane %v142, %v145
    %147 = vmatprep.subr.mxu0 0.0
    %148 = vmatpush1.msra.mxu0 %v126
    %149 = vmatprep.subr.mxu0 0.0
    %150 = vmatpush1.msra.mxu0 %v127
    %151 = vmatprep.subr.mxu0 0.0
    %152 = vmatpush1.msra.mxu0 %v128
    %153 = vmatprep.subr.mxu0 0.0
    %154 = vmatpush1.msra.mxu0 %v129
    %155 = vmatprep.subr.mxu0 0.0
    %156 = vmatpush1.msra.mxu0 %v130
    %157 = vmatprep.subr.mxu0 0.0
    %158 = vmatpush1.msra.mxu0 %v131
    %159 = vmatprep.subr.mxu0 0.0
    %160 = vmatpush1.msra.mxu0 %v132
    %161 = vmatprep.subr.mxu0 0.0
    %162 = vmatpush1.msra.mxu0 %v133
    %163 = vmatprep.subr.mxu0 0.0
    %164 = vmatpush1.msra.mxu0 %v134
    %165 = vmatprep.subr.mxu0 0.0
    %166 = vmatpush1.msra.mxu0 %v135
    %167 = vmatprep.subr.mxu0 0.0
    %168 = vmatpush1.msra.mxu0 %v136
    %169 = vmatprep.subr.mxu0 0.0
    %170 = vmatpush1.msra.mxu0 %v137
    %171 = vmatprep.subr.mxu0 0.0
    %172 = vmatpush1.msra.mxu0 %v138
    %173 = vmatprep.subr.mxu0 0.0
    %174 = vmatpush1.msra.mxu0 %v139
    %175 = vmatprep.subr.mxu0 0.0
    %176 = vmatpush1.msra.mxu0 %v140
    %177 = vmatprep.subr.mxu0 0.0
    %178 = vmatpush1.msra.mxu0 %v141
    %179 = vmatprep.subr.mxu0 0.0
    %180 = vmatpush1.msra.mxu0 0.0
    %181 = vmatprep.subr.mxu0 0.0
    %182 = vmatpush1.msra.mxu0 0.0
    %183 = vmatprep.subr.mxu0 0.0
    %184 = vmatpush1.msra.mxu0 0.0
    %185 = vmatprep.subr.mxu0 0.0
    %186 = vmatpush1.msra.mxu0 0.0
    %187 = vmatprep.subr.mxu0 0.0
    %188 = vmatpush1.msra.mxu0 0.0
    %189 = vmatprep.subr.mxu0 0.0
    %190 = vmatpush1.msra.mxu0 0.0
    %191 = vmatprep.subr.mxu0 0.0
    %192 = vmatpush1.msra.mxu0 0.0
    %193 = vmatprep.subr.mxu0 0.0
    %194 = vmatpush1.msra.mxu0 0.0
    %195 = vmatprep.subr.mxu0 0.0
    %196 = vmatpush1.msra.mxu0 0.0
    %197 = vmatprep.subr.mxu0 0.0
    %198 = vmatpush1.msra.mxu0 0.0
    %199 = vmatprep.subr.mxu0 0.0
    %200 = vmatpush1.msra.mxu0 0.0
    %201 = vmatprep.subr.mxu0 0.0
    %202 = vmatpush1.msra.mxu0 0.0
    %203 = vmatprep.subr.mxu0 0.0
    %204 = vmatpush1.msra.mxu0 0.0
    %205 = vmatprep.subr.mxu0 0.0
    %206 = vmatpush1.msra.mxu0 0.0
    %207 = vmatprep.subr.mxu0 0.0
    %208 = vmatpush1.msra.mxu0 0.0
    %209 = vmatprep.subr.mxu0 0.0
    %210 = vmatpush1.msra.mxu0 0.0
    %211 = vmatprep.mubr.f32.mxu0 0.0
    %212 = vmatmul.mubr.f32.gmra.mrb[0].mxu0 %v125
    %v213 = vpop.f32.mrb[0].mxu0
    %v214 = vadd.f32 %v146, %v213
    %v215 = vpop.f32.mrb[0].mxu0
    %216 = vdwg.mxu0
    %vm217 = vcmp.gt.f32.partialorder %v214, 0.0
    %v218 = vmin.f32 %v214, 0.0
    %v219 = vmul.f32 %v218, 1.442695
    %v220 = vpow.pop %v219
    %v221 = vsub.f32 %v220, 1.0
    %v222 = vsel %vm217, %v214, %v221
    %v223 = vld [vmem:[#allocation5 + $0xa0] sm:$0xff]
    %v224 = vld [vmem:[#allocation5 + $0xa8] sm:$0xff]
    %v225 = vld [vmem:[#allocation5 + $0xb0] sm:$0xff]
    %v226 = vld [vmem:[#allocation5 + $0xb8] sm:$0xff]
    %v227 = vld [vmem:[#allocation5 + $0xc0] sm:$0xff]
    %v228 = vld [vmem:[#allocation5 + $0xc8] sm:$0xff]
    %v229 = vld [vmem:[#allocation5 + $0xd0] sm:$0xff]
    %v230 = vld [vmem:[#allocation5 + $0xd8] sm:$0xff]
    %v231 = vld [vmem:[#allocation5 + $0xe0] sm:$0xff]
    %v232 = vld [vmem:[#allocation5 + $0xe8] sm:$0xff]
    %v233 = vld [vmem:[#allocation5 + $0xf0] sm:$0xff]
    %v234 = vld [vmem:[#allocation5 + $0xf8] sm:$0xff]
    %v235 = vld [vmem:[#allocation5 + $0x100] sm:$0xff]
    %v236 = vld [vmem:[#allocation5 + $0x108] sm:$0xff]
    %v237 = vld [vmem:[#allocation5 + $0x110] sm:$0xff]
    %v238 = vld [vmem:[#allocation5 + $0x118] sm:$0xff]
    %239 = vmatprep.subr.mxu0 0.0
    %240 = vmatpush1.msra.mxu0 %v223
    %241 = vmatprep.subr.mxu0 0.0
    %242 = vmatpush1.msra.mxu0 %v224
    %243 = vmatprep.subr.mxu0 0.0
    %244 = vmatpush1.msra.mxu0 %v225
    %245 = vmatprep.subr.mxu0 0.0
    %246 = vmatpush1.msra.mxu0 %v226
    %247 = vmatprep.subr.mxu0 0.0
    %248 = vmatpush1.msra.mxu0 %v227
    %249 = vmatprep.subr.mxu0 0.0
    %250 = vmatpush1.msra.mxu0 %v228
    %251 = vmatprep.subr.mxu0 0.0
    %252 = vmatpush1.msra.mxu0 %v229
    %253 = vmatprep.subr.mxu0 0.0
    %254 = vmatpush1.msra.mxu0 %v230
    %255 = vmatprep.subr.mxu0 0.0
    %256 = vmatpush1.msra.mxu0 %v231
    %257 = vmatprep.subr.mxu0 0.0
    %258 = vmatpush1.msra.mxu0 %v232
    %259 = vmatprep.subr.mxu0 0.0
    %260 = vmatpush1.msra.mxu0 %v233
    %261 = vmatprep.subr.mxu0 0.0
    %262 = vmatpush1.msra.mxu0 %v234
    %263 = vmatprep.subr.mxu0 0.0
    %264 = vmatpush1.msra.mxu0 %v235
    %265 = vmatprep.subr.mxu0 0.0
    %266 = vmatpush1.msra.mxu0 %v236
    %267 = vmatprep.subr.mxu0 0.0
    %268 = vmatpush1.msra.mxu0 %v237
    %269 = vmatprep.subr.mxu0 0.0
    %270 = vmatpush1.msra.mxu0 %v238
    %271 = vmatprep.subr.mxu0 0.0
    %272 = vmatpush1.msra.mxu0 0.0
    %273 = vmatprep.subr.mxu0 0.0
    %274 = vmatpush1.msra.mxu0 0.0
    %275 = vmatprep.subr.mxu0 0.0
    %276 = vmatpush1.msra.mxu0 0.0
    %277 = vmatprep.subr.mxu0 0.0
    %278 = vmatpush1.msra.mxu0 0.0
    %279 = vmatprep.subr.mxu0 0.0
    %280 = vmatpush1.msra.mxu0 0.0
    %281 = vmatprep.subr.mxu0 0.0
    %282 = vmatpush1.msra.mxu0 0.0
    %283 = vmatprep.subr.mxu0 0.0
    %284 = vmatpush1.msra.mxu0 0.0
    %285 = vmatprep.subr.mxu0 0.0
    %286 = vmatpush1.msra.mxu0 0.0
    %287 = vmatprep.subr.mxu0 0.0
    %288 = vmatpush1.msra.mxu0 0.0
    %289 = vmatprep.subr.mxu0 0.0
    %290 = vmatpush1.msra.mxu0 0.0
    %291 = vmatprep.subr.mxu0 0.0
    %292 = vmatpush1.msra.mxu0 0.0
    %293 = vmatprep.subr.mxu0 0.0
    %294 = vmatpush1.msra.mxu0 0.0
    %295 = vmatprep.subr.mxu0 0.0
    %296 = vmatpush1.msra.mxu0 0.0
    %297 = vmatprep.subr.mxu0 0.0
    %298 = vmatpush1.msra.mxu0 0.0
    %299 = vmatprep.subr.mxu0 0.0
    %300 = vmatpush1.msra.mxu0 0.0
    %301 = vmatprep.subr.mxu0 0.0
    %302 = vmatpush1.msra.mxu0 0.0
    %303 = vmatprep.mubr.f32.mxu0 0.0
    %304 = vmatmul.mubr.f32.gmra.mrb[0].mxu0 %v222
    %v305 = vpop.f32.mrb[0].mxu0
    %v306 = vadd.f32 0.0, %v305
    %v307 = vpop.f32.mrb[0].mxu0
    %308 = vdwg.mxu0
    %v309 = vlaneseq
    %v310 = vand.u32 %v309, 127
    %vm311 = vcmp.lt.s32.totalorder %v310, 4
    %v312 = vand.u32 2147483647, %v306
    %v313 = vsub.f32 0.0, %v312
    %v314 = vmul.f32 %v313, 1.442695
    %v315 = vpow.pop %v314
    %v316 = vadd.f32 %v315, 1.0
    %v317 = vrcp.pop %v316
    %vm318 = vcmp.ge.f32.partialorder %v306, 0.0
    %v319 = vmul.f32 %v315, %v317
    %v320 = vsel %vm318, %v317, %v319
    %v321 = vsel %vm311, %v306, %v320
    %322 = vst [vmem:[#allocation7] sm:$0xff] %v321
    // Predicated region
    $region18: #{tpu_custom_call.1} parent=1 // pred_check
      _
    $region19: #{tpu_custom_call.1} parent=1 // pred_check_branch
      %324 = sbr.rel (0) target = $region21
    $region20: #{tpu_custom_call.1} parent=1 // pred_region
      %s326 = ssub.s32 128, 128
      %327 = vsyncadd [#allocation4], %s326
      %s329 = sshll.u32 [#allocation7], 4
      %s330 = int_to_ptr.vmem [resolvable:$true] %s329
      %332 = dma.vmem_to_hbm [thread:$0]  %s330, 128, %s2, [#allocation4]
    $region21: #{tpu_custom_call.1} parent=1 // pred_fallthru
      _
    // Predicated region
    $region22: #{tpu_custom_call.1} parent=1 // pred_check
      _
    $region23: #{tpu_custom_call.1} parent=1 // pred_check_branch
      %334 = sbr.rel (0) target = $region25
    $region24: #{tpu_custom_call.1} parent=1 // pred_region
      %335 = dma.done [#allocation4], 128
    $region25: #{tpu_custom_call.1} parent=1 // pred_fallthru
      _
    %336 = vsyncpa [#allocation3], 1
    %337 = vsyncpa [#allocation6], 1
    %338 = vsyncpa [#allocation4], 1

</llo_original>
